<compile_context>
chip_gen: v7x
topology: tpu7x:2x2x1
jax: 0.10.0
libtpu: 0.0.40
codegen_flags: <defaults>
</compile_context>

<pallas_src>
import functools

import jax
import jax.numpy as jnp
from jax.experimental import pallas as pl

LANE = 128  # TPU lane width; head output padded to this for dense stores


# ----------------------------------------------------------------------------
# Fused Pallas kernel
# ----------------------------------------------------------------------------
def _multihead_kernel(patches_ref, cw_ref, cb_ref, hw_ref, hb_ref, out_ref):
    """conv-as-matmul (+bias+ReLU) -> NCHW flatten -> active head (1 matmul).

    patches_ref: [C*k*k, B*Ho*Wo]  bf16 im2col patches, col index = b*HoWo + p
    cw_ref:      [F, C*k*k]        bf16 conv weight (PyTorch [F,C,kh,kw] flat)
    cb_ref:      [F, 1]            f32 conv bias
    hw_ref:      [F*Ho*Wo, Npad]   bf16 active head weight (W.T, lane-padded)
    hb_ref:      [1, Npad]         f32 active head bias (zero padded)
    out_ref:     [B_pad, Npad]     f32 padded logits (one unmasked full store)
    """
    n_f = cw_ref.shape[0]               # conv output channels (8)
    k_fp = hw_ref.shape[0]              # F * Ho*Wo (512)
    howo = k_fp // n_f                  # spatial positions per image (64)
    n_b = patches_ref.shape[1] // howo  # true batch size (2)
    rows_pad = out_ref.shape[0]         # sublane-padded batch (8)

    # ---- feature model: Conv2d(k3,s2,p1) for the WHOLE batch in one matmul.
    # Result [F, B*HoWo] = [8, 128] is a single f32 vreg; bias+ReLU in f32.
    conv = jnp.dot(cw_ref[...], patches_ref[...],
                   preferred_element_type=jnp.float32)        # [F, B*HoWo]
    conv = jnp.maximum(conv + cb_ref[...], 0.0)

    # ---- NCHW flatten: [F, B*HoWo] -> [B_pad, F*HoWo].
    # Static slices + concatenate of a single-vreg source (no jnp.reshape /
    # transpose lowering risk); padding rows are zeros so the head matmul is
    # a full 8-row MXU op and the output store is one unmasked 8x128 vst.
    rows = []
    for b in range(n_b):                              # static unroll, B tiny
        blk = conv[:, b * howo:(b + 1) * howo]        # [F, HoWo]
        rows.append(jnp.concatenate(
            [blk[f:f + 1, :] for f in range(n_f)], axis=1))   # [1, F*HoWo]
    if rows_pad > n_b:
        rows.append(jnp.zeros((rows_pad - n_b, k_fp), jnp.float32))
    feats = jnp.concatenate(rows, axis=0).astype(hw_ref.dtype)  # [B_pad, 512]

    # ---- active head: ONE [B_pad, F*HoWo] @ [F*HoWo, Npad] matmul;
    # bias added once to the matmul result; single full-tile store.
    logits = jnp.dot(feats, hw_ref[...], preferred_element_type=jnp.float32)
    out_ref[...] = (logits + hb_ref[...]).astype(out_ref.dtype)


def _fused_multihead_call(patches, cw, cb, hw, hb, *, b_pad):
    n_pad = hw.shape[-1]
    return pl.pallas_call(
        _multihead_kernel,
        out_shape=jax.ShapeDtypeStruct((b_pad, n_pad), jnp.float32),
        in_specs=[
            pl.BlockSpec(patches.shape, lambda: (0, 0)),
            pl.BlockSpec(cw.shape, lambda: (0, 0)),
            pl.BlockSpec(cb.shape, lambda: (0, 0)),
            pl.BlockSpec(hw.shape, lambda: (0, 0)),
            pl.BlockSpec(hb.shape, lambda: (0, 0)),
        ],
        out_specs=pl.BlockSpec((b_pad, n_pad), lambda: (0, 0)),
    )(patches, cw, cb, hw, hb)


# ----------------------------------------------------------------------------
# XLA glue: im2col emitted directly in kernel-native [C*k*k, B*Ho*Wo] layout
# ----------------------------------------------------------------------------
def im2col_cq(x, k=3, stride=2, pad=1):
    """Conv patches as bf16 [C*k*k, B*Ho*Wo]; row = c*k*k + ki*k + kj,
    column = b*Ho*Wo + (ho*Wo + wo)."""
    b, c, h, w = x.shape
    ho = (h + 2 * pad - k) // stride + 1
    wo = (w + 2 * pad - k) // stride + 1
    xp = jnp.pad(x, ((0, 0), (0, 0), (pad, pad), (pad, pad)))
    cols = [xp[:, :, i:i + stride * ho:stride, j:j + stride * wo:stride]
            for i in range(k) for j in range(k)]           # k*k x [B,C,Ho,Wo]
    p = jnp.stack(cols, axis=2)                            # [B, C, k*k, Ho, Wo]
    p = p.reshape(b, c * k * k, ho * wo)                   # [B, CKK, HoWo]
    p = jnp.swapaxes(p, 0, 1).reshape(c * k * k, b * ho * wo)
    return p.astype(jnp.bfloat16)


# ----------------------------------------------------------------------------
# Forward pass (hot path)
# ----------------------------------------------------------------------------
def multihead_forward(x, prep, *, n_classes):
    b = x.shape[0]
    b_pad = max(8, ((b + 7) // 8) * 8)          # sublane-dense output rows
    patches = im2col_cq(x)                      # [C*k*k, B*Ho*Wo] bf16
    out_pad = _fused_multihead_call(
        patches, prep["conv_w"], prep["conv_b"],
        prep["head_w"], prep["head_b"], b_pad=b_pad)
    return out_pad[:b, :n_classes]              # drop sublane/lane padding


# ----------------------------------------------------------------------------
# One-time parameter preparation (static; outside the per-forward hot path)
# ----------------------------------------------------------------------------
def prepare_params(params, active_head):
    """Select the active head (mirrors __set_active_head__) and pre-layout
    weights: conv weight flattened to [F, C*k*k] bf16; head weight flattened
    to [F*Ho*Wo, Npad] bf16 (row index == NCHW flatten index f*HoWo + p)."""
    conv_w = params["conv_w"]                   # [F, C, k, k] (PyTorch OIHW)
    f = conv_w.shape[0]
    n_classes = params["head_b"].shape[1]
    n_pad = ((n_classes + LANE - 1) // LANE) * LANE
    cw = conv_w.reshape(f, -1).astype(jnp.bfloat16)              # [F, C*k*k]
    cb = params["conv_b"].reshape(f, 1).astype(jnp.float32)
    wh = params["head_w"][active_head]          # [n_classes, F*Ho*Wo]
    hw = jnp.pad(wh.T, ((0, 0), (0, n_pad - n_classes))).astype(jnp.bfloat16)
    hb = jnp.pad(params["head_b"][active_head],
                 (0, n_pad - n_classes)).astype(jnp.float32)
    return {"conv_w": cw, "conv_b": cb,
            "head_w": hw, "head_b": hb.reshape(1, n_pad)}


def init_params(key, *, in_ch=4, out_ch=8, k=3, num_features=512,
                n_classes=10, n_tasks=3):
    k0, k1, k2, k3 = jax.random.split(key, 4)
    conv_w = 0.1 * jax.random.normal(k0, (out_ch, in_ch, k, k), jnp.float32)
    conv_b = 0.1 * jax.random.normal(k1, (out_ch,), jnp.float32)
    head_w = 0.05 * jax.random.normal(k2, (n_tasks, n_classes, num_features),
                                      jnp.float32)
    head_b = 0.05 * jax.random.normal(k3, (n_tasks, n_classes), jnp.float32)
    return {"conv_w": conv_w, "conv_b": conv_b,
            "head_w": head_w, "head_b": head_b}


# ----------------------------------------------------------------------------
# References for the numerical self-check (independent XLA paths)
# ----------------------------------------------------------------------------
def reference_forward_f32(x, conv_w, conv_b, head_w, head_b):
    hi = jax.lax.Precision.HIGHEST
    out = jax.lax.conv_general_dilated(
        x, conv_w, window_strides=(2, 2), padding=((1, 1), (1, 1)),
        dimension_numbers=("NCHW", "OIHW", "NCHW"), precision=hi)
    out = jnp.maximum(out + conv_b[None, :, None, None], 0.0)
    feats = out.reshape(out.shape[0], -1)       # NCHW flatten == view(B, -1)
    return jnp.matmul(feats, head_w.T, precision=hi) + head_b


def reference_forward_matched(x, conv_w, conv_b, head_w, head_b):
    """Same operand precision as the kernel (bf16 operands, f32 accumulate):
    a strict check against this catches any layout/permutation/padding bug."""
    out = jax.lax.conv_general_dilated(
        x.astype(jnp.bfloat16), conv_w.astype(jnp.bfloat16),
        window_strides=(2, 2), padding=((1, 1), (1, 1)),
        dimension_numbers=("NCHW", "OIHW", "NCHW"),
        preferred_element_type=jnp.float32)
    out = jnp.maximum(out + conv_b[None, :, None, None], 0.0)
    feats = out.reshape(out.shape[0], -1).astype(jnp.bfloat16)
    return jnp.matmul(feats, head_w.T.astype(jnp.bfloat16),
                      preferred_element_type=jnp.float32) + head_b


if __name__ == "__main__":
    # config: input_shape=(B,4,16,16), n_classes=10, n_tasks=3, active head 0
    B, C, H, W = 2, 4, 16, 16
    F, KK, STRIDE, PAD = 8, 3, 2, 1
    HO = (H + 2 * PAD - KK) // STRIDE + 1       # 8
    WO = (W + 2 * PAD - KK) // STRIDE + 1       # 8
    NUM_FEATURES = F * HO * WO                  # __calculate_num_features__ == 512
    N_CLASSES, N_TASKS, ACTIVE_HEAD = 10, 3, 0

    key = jax.random.PRNGKey(0)
    kx, kp = jax.random.split(key)
    x = jax.random.normal(kx, (B, C, H, W), jnp.float32)
    params = init_params(kp, in_ch=C, out_ch=F, k=KK, num_features=NUM_FEATURES,
                         n_classes=N_CLASSES, n_tasks=N_TASKS)
    prep = prepare_params(params, ACTIVE_HEAD)

    fwd = jax.jit(functools.partial(multihead_forward, n_classes=N_CLASSES))
    logits = fwd(x, prep)
    jax.block_until_ready(logits)
    assert logits.shape == (B, N_CLASSES)

    # (1) strict layout check vs a matched-precision XLA path: a wrong feature
    #     permutation / padding bug produces O(0.5) errors, far above 5e-3.
    ref_m = reference_forward_matched(
        x, params["conv_w"], params["conv_b"],
        params["head_w"][ACTIVE_HEAD], params["head_b"][ACTIVE_HEAD])
    assert bool(jnp.allclose(logits, ref_m, atol=5e-3, rtol=5e-3)), \
        "Pallas MultiHead mismatch vs matched-precision (bf16-operand) reference"

    # (2) end-to-end sanity vs the true f32 reference (difference is only the
    #     bf16 rounding of matmul operands; accumulation is f32 everywhere).
    ref = reference_forward_f32(
        x, params["conv_w"], params["conv_b"],
        params["head_w"][ACTIVE_HEAD], params["head_b"][ACTIVE_HEAD])
    assert bool(jnp.allclose(logits, ref, atol=3e-2, rtol=3e-2)), \
        "Pallas MultiHead mismatch vs f32 reference"

    print("KERNEL_OK")
</pallas_src>

<mosaic_0001>
module attributes {stable_mosaic.version = 11 : i64} {
  func.func @_multihead_kernel(%arg0: memref<36x128xbf16, #tpu.memory_space<vmem>>, %arg1: memref<8x36xbf16, #tpu.memory_space<vmem>>, %arg2: memref<8x1xf32, #tpu.memory_space<vmem>>, %arg3: memref<512x128xbf16, #tpu.memory_space<vmem>>, %arg4: memref<1x128xf32, #tpu.memory_space<vmem>>, %arg5: memref<8x128xf32, #tpu.memory_space<vmem>>) attributes {dimension_semantics = [], scalar_prefetch = 0 : i64, scratch_operands = 0 : i64, tpu.core_type = #tpu.core_type<tc>} {
    %c0 = arith.constant 0 : index
    %c0_0 = arith.constant 0 : index
    %0 = vector.load %arg1[%c0, %c0_0] : memref<8x36xbf16, #tpu.memory_space<vmem>>, vector<8x36xbf16>
    %c0_1 = arith.constant 0 : index
    %c0_2 = arith.constant 0 : index
    %1 = vector.load %arg0[%c0_1, %c0_2] : memref<36x128xbf16, #tpu.memory_space<vmem>>, vector<36x128xbf16>
    %cst = arith.constant dense<0.000000e+00> : vector<8x128xf32>
    %2 = tpu.matmul %0, %1, %cst {dimension_numbers = #tpu.dot_dimension_numbers<[1], [0], [0], [1], [0, 0, 1, 1], [], []>} : vector<8x36xbf16>, vector<36x128xbf16>, vector<8x128xf32> -> vector<8x128xf32>
    %c0_3 = arith.constant 0 : index
    %c0_4 = arith.constant 0 : index
    %3 = vector.load %arg2[%c0_3, %c0_4] : memref<8x1xf32, #tpu.memory_space<vmem>>, vector<8x1xf32>
    %4 = vector.broadcast %3 : vector<8x1xf32> to vector<8x128xf32>
    %5 = arith.addf %2, %4 : vector<8x128xf32>
    %cst_5 = arith.constant 0.000000e+00 : f32
    %6 = vector.broadcast %cst_5 : f32 to vector<8x128xf32>
    %7 = arith.maximumf %5, %6 : vector<8x128xf32>
    %8 = vector.extract_strided_slice %7 {offsets = [0, 0], sizes = [8, 64], strides = [1, 1]} : vector<8x128xf32> to vector<8x64xf32>
    %9 = vector.extract_strided_slice %8 {offsets = [0, 0], sizes = [1, 64], strides = [1, 1]} : vector<8x64xf32> to vector<1x64xf32>
    %10 = vector.extract_strided_slice %8 {offsets = [1, 0], sizes = [1, 64], strides = [1, 1]} : vector<8x64xf32> to vector<1x64xf32>
    %11 = vector.extract_strided_slice %8 {offsets = [2, 0], sizes = [1, 64], strides = [1, 1]} : vector<8x64xf32> to vector<1x64xf32>
    %12 = vector.extract_strided_slice %8 {offsets = [3, 0], sizes = [1, 64], strides = [1, 1]} : vector<8x64xf32> to vector<1x64xf32>
    %13 = vector.extract_strided_slice %8 {offsets = [4, 0], sizes = [1, 64], strides = [1, 1]} : vector<8x64xf32> to vector<1x64xf32>
    %14 = vector.extract_strided_slice %8 {offsets = [5, 0], sizes = [1, 64], strides = [1, 1]} : vector<8x64xf32> to vector<1x64xf32>
    %15 = vector.extract_strided_slice %8 {offsets = [6, 0], sizes = [1, 64], strides = [1, 1]} : vector<8x64xf32> to vector<1x64xf32>
    %16 = vector.extract_strided_slice %8 {offsets = [7, 0], sizes = [1, 64], strides = [1, 1]} : vector<8x64xf32> to vector<1x64xf32>
    %17 = tpu.concatenate %9, %10, %11, %12, %13, %14, %15, %16 in 1 : vector<1x64xf32>, vector<1x64xf32>, vector<1x64xf32>, vector<1x64xf32>, vector<1x64xf32>, vector<1x64xf32>, vector<1x64xf32>, vector<1x64xf32> -> vector<1x512xf32>
    %18 = vector.extract_strided_slice %7 {offsets = [0, 64], sizes = [8, 64], strides = [1, 1]} : vector<8x128xf32> to vector<8x64xf32>
    %19 = vector.extract_strided_slice %18 {offsets = [0, 0], sizes = [1, 64], strides = [1, 1]} : vector<8x64xf32> to vector<1x64xf32>
    %20 = vector.extract_strided_slice %18 {offsets = [1, 0], sizes = [1, 64], strides = [1, 1]} : vector<8x64xf32> to vector<1x64xf32>
    %21 = vector.extract_strided_slice %18 {offsets = [2, 0], sizes = [1, 64], strides = [1, 1]} : vector<8x64xf32> to vector<1x64xf32>
    %22 = vector.extract_strided_slice %18 {offsets = [3, 0], sizes = [1, 64], strides = [1, 1]} : vector<8x64xf32> to vector<1x64xf32>
    %23 = vector.extract_strided_slice %18 {offsets = [4, 0], sizes = [1, 64], strides = [1, 1]} : vector<8x64xf32> to vector<1x64xf32>
    %24 = vector.extract_strided_slice %18 {offsets = [5, 0], sizes = [1, 64], strides = [1, 1]} : vector<8x64xf32> to vector<1x64xf32>
    %25 = vector.extract_strided_slice %18 {offsets = [6, 0], sizes = [1, 64], strides = [1, 1]} : vector<8x64xf32> to vector<1x64xf32>
    %26 = vector.extract_strided_slice %18 {offsets = [7, 0], sizes = [1, 64], strides = [1, 1]} : vector<8x64xf32> to vector<1x64xf32>
    %27 = tpu.concatenate %19, %20, %21, %22, %23, %24, %25, %26 in 1 : vector<1x64xf32>, vector<1x64xf32>, vector<1x64xf32>, vector<1x64xf32>, vector<1x64xf32>, vector<1x64xf32>, vector<1x64xf32>, vector<1x64xf32> -> vector<1x512xf32>
    %cst_6 = arith.constant 0.000000e+00 : f32
    %28 = vector.broadcast %cst_6 : f32 to vector<6x512xf32>
    %29 = tpu.concatenate %17, %27, %28 in 0 : vector<1x512xf32>, vector<1x512xf32>, vector<6x512xf32> -> vector<8x512xf32>
    %30 = arith.truncf %29 : vector<8x512xf32> to vector<8x512xbf16>
    %c0_7 = arith.constant 0 : index
    %c0_8 = arith.constant 0 : index
    %31 = vector.load %arg3[%c0_7, %c0_8] : memref<512x128xbf16, #tpu.memory_space<vmem>>, vector<512x128xbf16>
    %cst_9 = arith.constant dense<0.000000e+00> : vector<8x128xf32>
    %32 = tpu.matmul %30, %31, %cst_9 {dimension_numbers = #tpu.dot_dimension_numbers<[1], [0], [0], [1], [0, 0, 1, 1], [], []>} : vector<8x512xbf16>, vector<512x128xbf16>, vector<8x128xf32> -> vector<8x128xf32>
    %c0_10 = arith.constant 0 : index
    %c0_11 = arith.constant 0 : index
    %33 = vector.load %arg4[%c0_10, %c0_11] : memref<1x128xf32, #tpu.memory_space<vmem>>, vector<1x128xf32>
    %34 = vector.broadcast %33 : vector<1x128xf32> to vector<8x128xf32>
    %35 = arith.addf %32, %34 : vector<8x128xf32>
    %c0_12 = arith.constant 0 : index
    %c0_13 = arith.constant 0 : index
    %36 = vector.load %arg5[%c0_12, %c0_13] : memref<8x128xf32, #tpu.memory_space<vmem>>, vector<8x128xf32>
    tpu.vector_store %arg5[%c0_12, %c0_13], %35 {strides = array<i32>} : memref<8x128xf32, #tpu.memory_space<vmem>>, vector<8x128xf32>,
    return
  }
}

</mosaic_0001>

<llo_original>
// kernel: multihead_forward.1
$region0: #{multihead_forward.1}
  #allocation0 [shape = 'u32[]', space=smem, size = 0x4, offset = 0x4, fixed_abs, tag = 'smem constant byte address 0x4 - core index']
  #allocation1 [shape = 'u32[144,128]{1,0:T(1,128)}', space=vmem, size = 0x12000, scoped, tag = 'internal scratch']
  %s0 = inlined_call_operand.vmem [shape: bf16[36,128], index: 0, kind: input, shape index: {}]
  %s1 = inlined_call_operand.vmem [shape: bf16[8,36], index: 1, kind: input, shape index: {}]
  %s2 = inlined_call_operand.vmem [shape: f32[8,1], index: 2, kind: input, shape index: {}]
  %s3 = inlined_call_operand.vmem [shape: bf16[512,128], index: 3, kind: input, shape index: {}]
  %s4 = inlined_call_operand.vmem [shape: f32[1,128], index: 4, kind: input, shape index: {}]
  %s5 = inlined_call_operand.vmem [shape: f32[8,128], index: 5, kind: output, shape index: {}]
  %s6 = sld [smem:[#allocation0]]
  $region30: #{multihead_forward.1} parent=0
    _
  %s8 = ssub.s32 1, %s6
  %s9 = scalar_select 0, %s8, %s6
  // Predicated region
  $region2: #{multihead_forward.1} parent=0 // pred_check
    _
  $region3: #{multihead_forward.1} parent=0 // pred_check_branch
    %11 = sbr.rel (0) target = $region5
  $region4: #{multihead_forward.1} parent=0 // pred_region
    _
  $region5: #{multihead_forward.1} parent=0 // pred_fallthru
    _
  // Predicated region
  $region6: #{multihead_forward.1} parent=0 // pred_check
    _
  $region7: #{multihead_forward.1} parent=0 // pred_check_branch
    %13 = sbr.rel (0) target = $region9
  $region8: #{multihead_forward.1} parent=0 // pred_region
    _
  $region9: #{multihead_forward.1} parent=0 // pred_fallthru
    _
  // Predicated region
  $region10: #{multihead_forward.1} parent=0 // pred_check
    _
  $region11: #{multihead_forward.1} parent=0 // pred_check_branch
    %15 = sbr.rel (0) target = $region13
  $region12: #{multihead_forward.1} parent=0 // pred_region
    _
  $region13: #{multihead_forward.1} parent=0 // pred_fallthru
    _
  // Predicated region
  $region14: #{multihead_forward.1} parent=0 // pred_check
    _
  $region15: #{multihead_forward.1} parent=0 // pred_check_branch
    %17 = sbr.rel (0) target = $region17
  $region16: #{multihead_forward.1} parent=0 // pred_region
    _
  $region17: #{multihead_forward.1} parent=0 // pred_fallthru
    _
  // Predicated region
  $region18: #{multihead_forward.1} parent=0 // pred_check
    _
  $region19: #{multihead_forward.1} parent=0 // pred_check_branch
    %19 = sbr.rel (0) target = $region21
  $region20: #{multihead_forward.1} parent=0 // pred_region
    _
  $region21: #{multihead_forward.1} parent=0 // pred_fallthru
    _
  %v21 = vld [vmem:[%s1] sm:$0xf]
  %v22 = vld [vmem:[%s0] sm:$0xf]
  %v23 = vld [vmem:[%s0 + $0x4] sm:$0xf]
  %v24 = vld [vmem:[%s0 + $0x8] sm:$0xf]
  %v25 = vld [vmem:[%s0 + $0xc] sm:$0xf]
  %v26 = vld [vmem:[%s0 + $0x10] sm:$0x3]
  %v27 = vld [vmem:[%s2] sm:$0xff]
  %29 = vset.pattern.permute.xlu0 0
  %30 = vperm.xlu0 %29, %v27
  %v31 = vpop.permute.xlu0 %30
  %v38 = vunpack.c.l.b16 %v22
  %v39 = vunpack.c.l.b16 %v23
  %v40 = vunpack.c.l.b16 %v24
  %v41 = vunpack.c.l.b16 %v25
  %v42 = vunpack.c.l.b16 %v26
  %v43 = vpack.c.b16 %v39, %v38
  %v44 = vpack.c.b16 %v41, %v40
  %v45 = vpack.c.b16 %v42, %v42
  %vm48 = vcmask 293888
  %v50 = vsel %vm48, %v21, 0
  %vm52 = vcmask 1041408
  %v54 = vsel %vm52, %v45, 0
  %56 = vmatprep.subr.bf16.mxu0 0
  %57 = vmatpush1.bf16.msra.mxu0 %v43
  %58 = vmatprep.subr.bf16.mxu0 0
  %59 = vmatpush1.bf16.msra.mxu0 %v44
  %60 = vmatprep.subr.bf16.mxu0 0
  %61 = vmatpush1.bf16.msra.mxu0 %v54
  %62 = vmatprep.subr.bf16.mxu0 0
  %63 = vmatpush1.bf16.msra.mxu0 0
  %64 = vmatprep.subr.bf16.mxu0 0
  %65 = vmatpush1.bf16.msra.mxu0 0
  %66 = vmatprep.subr.bf16.mxu0 0
  %67 = vmatpush1.bf16.msra.mxu0 0
  %68 = vmatprep.subr.bf16.mxu0 0
  %69 = vmatpush1.bf16.msra.mxu0 0
  %70 = vmatprep.subr.bf16.mxu0 0
  %71 = vmatpush1.bf16.msra.mxu0 0
  %72 = vmatprep.subr.bf16.mxu0 0
  %73 = vmatpush1.bf16.msra.mxu0 0
  %74 = vmatprep.subr.bf16.mxu0 0
  %75 = vmatpush1.bf16.msra.mxu0 0
  %76 = vmatprep.subr.bf16.mxu0 0
  %77 = vmatpush1.bf16.msra.mxu0 0
  %78 = vmatprep.subr.bf16.mxu0 0
  %79 = vmatpush1.bf16.msra.mxu0 0
  %80 = vmatprep.subr.bf16.mxu0 0
  %81 = vmatpush1.bf16.msra.mxu0 0
  %82 = vmatprep.subr.bf16.mxu0 0
  %83 = vmatpush1.bf16.msra.mxu0 0
  %84 = vmatprep.subr.bf16.mxu0 0
  %85 = vmatpush1.bf16.msra.mxu0 0
  %86 = vmatprep.subr.bf16.mxu0 0
  %87 = vmatpush1.bf16.msra.mxu0 0
  %88 = vmatprep.mubr.bf16.mxu0 0
  %89 = vmatmul.mubr.bf16.gmra.mrb[0].mxu0 %v50
  %v90 = vpop.f32.mrb[0].mxu0
  %v91 = vadd.f32 %v31, %v90
  %v92 = vpop.f32.mrb[0].mxu0
  %v93 = vpop.f32.mrb[0].mxu0
  %v94 = vpop.f32.mrb[0].mxu0
  %95 = vdwg.mxu0
  %v96 = vmax.f32 %v91, 0.0
  %v98 = vrot.slane %v96, 1
  %99 = vrot.lane.b32.xlu0 %v98, 64
  %v100 = vpop.permute.xlu0 %99
  %v102 = vrot.slane %v96, 2
  %v104 = vrot.slane %v96, 3
  %105 = vrot.lane.b32.xlu0 %v104, 64
  %v106 = vpop.permute.xlu0 %105
  %v108 = vrot.slane %v96, 4
  %v110 = vrot.slane %v96, 5
  %111 = vrot.lane.b32.xlu0 %v110, 64
  %v112 = vpop.permute.xlu0 %111
  %v114 = vrot.slane %v96, 6
  %v116 = vrot.slane %v96, 7
  %117 = vrot.lane.b32.xlu0 %v116, 64
  %v118 = vpop.permute.xlu0 %117
  %vm120 = vcmask 523264
  %v121 = vsel %vm120, %v96, %v100
  %v122 = vsel %vm120, %v102, %v106
  %v123 = vsel %vm120, %v108, %v112
  %v124 = vsel %vm120, %v114, %v118
  %125 = vrot.lane.b32.xlu0 %v96, 64
  %v126 = vpop.permute.xlu0 %125
  %129 = vrot.lane.b32.xlu0 %v102, 64
  %v130 = vpop.permute.xlu0 %129
  %133 = vrot.lane.b32.xlu0 %v108, 64
  %v134 = vpop.permute.xlu0 %133
  %137 = vrot.lane.b32.xlu0 %v114, 64
  %v138 = vpop.permute.xlu0 %137
  %v141 = vsel %vm120, %v126, %v98
  %v142 = vsel %vm120, %v130, %v104
  %v143 = vsel %vm120, %v134, %v110
  %v144 = vsel %vm120, %v138, %v116
  %v149 = vrot.slane %v141, 7
  %v150 = vrot.slane %v142, 7
  %v151 = vrot.slane %v143, 7
  %v152 = vrot.slane %v144, 7
  %vm157 = vcmask 1040384
  %v158 = vsel %vm157, %v121, %v149
  %v159 = vsel %vm157, %v122, %v150
  %v160 = vsel %vm157, %v123, %v151
  %v161 = vsel %vm157, %v124, %v152
  %v162 = vsel %vm52, %v158, 0.0
  %v163 = vsel %vm52, %v159, 0.0
  %v164 = vsel %vm52, %v160, 0.0
  %v165 = vsel %vm52, %v161, 0.0
  %v166 = vpack.c.bf16 %v162, %v162
  %v167 = vpack.c.bf16 %v163, %v163
  %v168 = vpack.c.bf16 %v164, %v164
  %v169 = vpack.c.bf16 %v165, %v165
  %v170 = vld [vmem:[%s3] sm:$0xf]
  %v171 = vld [vmem:[%s3 + $0x4] sm:$0xf]
  %v172 = vld [vmem:[%s3 + $0x8] sm:$0xf]
  %v173 = vld [vmem:[%s3 + $0xc] sm:$0xf]
  %v174 = vld [vmem:[%s3 + $0x10] sm:$0xf]
  %v175 = vld [vmem:[%s3 + $0x14] sm:$0xf]
  %v176 = vld [vmem:[%s3 + $0x18] sm:$0xf]
  %v177 = vld [vmem:[%s3 + $0x1c] sm:$0xf]
  %v178 = vld [vmem:[%s3 + $0x20] sm:$0xf]
  %v179 = vld [vmem:[%s3 + $0x24] sm:$0xf]
  %v180 = vld [vmem:[%s3 + $0x28] sm:$0xf]
  %v181 = vld [vmem:[%s3 + $0x2c] sm:$0xf]
  %v182 = vld [vmem:[%s3 + $0x30] sm:$0xf]
  %v183 = vld [vmem:[%s3 + $0x34] sm:$0xf]
  %v184 = vld [vmem:[%s3 + $0x38] sm:$0xf]
  %v185 = vld [vmem:[%s3 + $0x3c] sm:$0xf]
  %v186 = vld [vmem:[%s3 + $0x40] sm:$0xf]
  %v187 = vld [vmem:[%s3 + $0x44] sm:$0xf]
  %v188 = vld [vmem:[%s3 + $0x48] sm:$0xf]
  %v189 = vld [vmem:[%s3 + $0x4c] sm:$0xf]
  %v190 = vld [vmem:[%s3 + $0x50] sm:$0xf]
  %v191 = vld [vmem:[%s3 + $0x54] sm:$0xf]
  %v192 = vld [vmem:[%s3 + $0x58] sm:$0xf]
  %v193 = vld [vmem:[%s3 + $0x5c] sm:$0xf]
  %v194 = vld [vmem:[%s3 + $0x60] sm:$0xf]
  %v195 = vld [vmem:[%s3 + $0x64] sm:$0xf]
  %v196 = vld [vmem:[%s3 + $0x68] sm:$0xf]
  %v197 = vld [vmem:[%s3 + $0x6c] sm:$0xf]
  %v198 = vld [vmem:[%s3 + $0x70] sm:$0xf]
  %v199 = vld [vmem:[%s3 + $0x74] sm:$0xf]
  %v200 = vld [vmem:[%s3 + $0x78] sm:$0xf]
  %v201 = vld [vmem:[%s3 + $0x7c] sm:$0xf]
  %v202 = vld [vmem:[%s3 + $0x80] sm:$0xf]
  %v203 = vld [vmem:[%s3 + $0x84] sm:$0xf]
  %v204 = vld [vmem:[%s3 + $0x88] sm:$0xf]
  %v205 = vld [vmem:[%s3 + $0x8c] sm:$0xf]
  %v206 = vld [vmem:[%s3 + $0x90] sm:$0xf]
  %v207 = vld [vmem:[%s3 + $0x94] sm:$0xf]
  %v208 = vld [vmem:[%s3 + $0x98] sm:$0xf]
  %v209 = vld [vmem:[%s3 + $0x9c] sm:$0xf]
  %v210 = vld [vmem:[%s3 + $0xa0] sm:$0xf]
  %v211 = vld [vmem:[%s3 + $0xa4] sm:$0xf]
  %v212 = vld [vmem:[%s3 + $0xa8] sm:$0xf]
  %v213 = vld [vmem:[%s3 + $0xac] sm:$0xf]
  %v214 = vld [vmem:[%s3 + $0xb0] sm:$0xf]
  %v215 = vld [vmem:[%s3 + $0xb4] sm:$0xf]
  %v216 = vld [vmem:[%s3 + $0xb8] sm:$0xf]
  %v217 = vld [vmem:[%s3 + $0xbc] sm:$0xf]
  %v218 = vld [vmem:[%s3 + $0xc0] sm:$0xf]
  %v219 = vld [vmem:[%s3 + $0xc4] sm:$0xf]
  %v220 = vld [vmem:[%s3 + $0xc8] sm:$0xf]
  %v221 = vld [vmem:[%s3 + $0xcc] sm:$0xf]
  %v222 = vld [vmem:[%s3 + $0xd0] sm:$0xf]
  %v223 = vld [vmem:[%s3 + $0xd4] sm:$0xf]
  %v224 = vld [vmem:[%s3 + $0xd8] sm:$0xf]
  %v225 = vld [vmem:[%s3 + $0xdc] sm:$0xf]
  %v226 = vld [vmem:[%s3 + $0xe0] sm:$0xf]
  %v227 = vld [vmem:[%s3 + $0xe4] sm:$0xf]
  %v228 = vld [vmem:[%s3 + $0xe8] sm:$0xf]
  %v229 = vld [vmem:[%s3 + $0xec] sm:$0xf]
  %v230 = vld [vmem:[%s3 + $0xf0] sm:$0xf]
  %v231 = vld [vmem:[%s3 + $0xf4] sm:$0xf]
  %v232 = vld [vmem:[%s3 + $0xf8] sm:$0xf]
  %v233 = vld [vmem:[%s3 + $0xfc] sm:$0xf]
  %v234 = vld [vmem:[%s4] sm:$0x1]
  %v236 = vlaneseq
  %v237 = vshrl.u32 %v236, 7
  %v238 = vsub.s32 0, %v237
  %v239 = vrot.slane %v234, %v238
  %v305 = vunpack.c.l.b16 %v170
  %v306 = vunpack.c.l.b16 %v171
  %v307 = vunpack.c.l.b16 %v172
  %v308 = vunpack.c.l.b16 %v173
  %v309 = vunpack.c.l.b16 %v174
  %v310 = vunpack.c.l.b16 %v175
  %v311 = vunpack.c.l.b16 %v176
  %v312 = vunpack.c.l.b16 %v177
  %v313 = vunpack.c.l.b16 %v178
  %v314 = vunpack.c.l.b16 %v179
  %v315 = vunpack.c.l.b16 %v180
  %v316 = vunpack.c.l.b16 %v181
  %v317 = vunpack.c.l.b16 %v182
  %v318 = vunpack.c.l.b16 %v183
  %v319 = vunpack.c.l.b16 %v184
  %v320 = vunpack.c.l.b16 %v185
  %v321 = vunpack.c.l.b16 %v186
  %v322 = vunpack.c.l.b16 %v187
  %v323 = vunpack.c.l.b16 %v188
  %v324 = vunpack.c.l.b16 %v189
  %v325 = vunpack.c.l.b16 %v190
  %v326 = vunpack.c.l.b16 %v191
  %v327 = vunpack.c.l.b16 %v192
  %v328 = vunpack.c.l.b16 %v193
  %v329 = vunpack.c.l.b16 %v194
  %v330 = vunpack.c.l.b16 %v195
  %v331 = vunpack.c.l.b16 %v196
  %v332 = vunpack.c.l.b16 %v197
  %v333 = vunpack.c.l.b16 %v198
  %v334 = vunpack.c.l.b16 %v199
  %v335 = vunpack.c.l.b16 %v200
  %v336 = vunpack.c.l.b16 %v201
  %v337 = vunpack.c.l.b16 %v202
  %v338 = vunpack.c.l.b16 %v203
  %v339 = vunpack.c.l.b16 %v204
  %v340 = vunpack.c.l.b16 %v205
  %v341 = vunpack.c.l.b16 %v206
  %v342 = vunpack.c.l.b16 %v207
  %v343 = vunpack.c.l.b16 %v208
  %v344 = vunpack.c.l.b16 %v209
  %v345 = vunpack.c.l.b16 %v210
  %v346 = vunpack.c.l.b16 %v211
  %v347 = vunpack.c.l.b16 %v212
  %v348 = vunpack.c.l.b16 %v213
  %v349 = vunpack.c.l.b16 %v214
  %v350 = vunpack.c.l.b16 %v215
  %v351 = vunpack.c.l.b16 %v216
  %v352 = vunpack.c.l.b16 %v217
  %v353 = vunpack.c.l.b16 %v218
  %v354 = vunpack.c.l.b16 %v219
  %v355 = vunpack.c.l.b16 %v220
  %v356 = vunpack.c.l.b16 %v221
  %v357 = vunpack.c.l.b16 %v222
  %v358 = vunpack.c.l.b16 %v223
  %v359 = vunpack.c.l.b16 %v224
  %v360 = vunpack.c.l.b16 %v225
  %v361 = vunpack.c.l.b16 %v226
  %v362 = vunpack.c.l.b16 %v227
  %v363 = vunpack.c.l.b16 %v228
  %v364 = vunpack.c.l.b16 %v229
  %v365 = vunpack.c.l.b16 %v230
  %v366 = vunpack.c.l.b16 %v231
  %v367 = vunpack.c.l.b16 %v232
  %v368 = vunpack.c.l.b16 %v233
  %v369 = vpack.c.b16 %v306, %v305
  %v370 = vpack.c.b16 %v308, %v307
  %v371 = vpack.c.b16 %v310, %v309
  %v372 = vpack.c.b16 %v312, %v311
  %v373 = vpack.c.b16 %v314, %v313
  %v374 = vpack.c.b16 %v316, %v315
  %v375 = vpack.c.b16 %v318, %v317
  %v376 = vpack.c.b16 %v320, %v319
  %v377 = vpack.c.b16 %v322, %v321
  %v378 = vpack.c.b16 %v324, %v323
  %v379 = vpack.c.b16 %v326, %v325
  %v380 = vpack.c.b16 %v328, %v327
  %v381 = vpack.c.b16 %v330, %v329
  %v382 = vpack.c.b16 %v332, %v331
  %v383 = vpack.c.b16 %v334, %v333
  %v384 = vpack.c.b16 %v336, %v335
  %v385 = vpack.c.b16 %v338, %v337
  %v386 = vpack.c.b16 %v340, %v339
  %v387 = vpack.c.b16 %v342, %v341
  %v388 = vpack.c.b16 %v344, %v343
  %v389 = vpack.c.b16 %v346, %v345
  %v390 = vpack.c.b16 %v348, %v347
  %v391 = vpack.c.b16 %v350, %v349
  %v392 = vpack.c.b16 %v352, %v351
  %v393 = vpack.c.b16 %v354, %v353
  %v394 = vpack.c.b16 %v356, %v355
  %v395 = vpack.c.b16 %v358, %v357
  %v396 = vpack.c.b16 %v360, %v359
  %v397 = vpack.c.b16 %v362, %v361
  %v398 = vpack.c.b16 %v364, %v363
  %v399 = vpack.c.b16 %v366, %v365
  %v400 = vpack.c.b16 %v368, %v367
  %433 = vmatprep.subr.bf16.mxu0 0
  %434 = vmatpush1.bf16.msra.mxu0 %v369
  %435 = vmatprep.subr.bf16.mxu0 0
  %436 = vmatpush1.bf16.msra.mxu0 %v370
  %437 = vmatprep.subr.bf16.mxu0 0
  %438 = vmatpush1.bf16.msra.mxu0 %v371
  %439 = vmatprep.subr.bf16.mxu0 0
  %440 = vmatpush1.bf16.msra.mxu0 %v372
  %441 = vmatprep.subr.bf16.mxu0 0
  %442 = vmatpush1.bf16.msra.mxu0 %v373
  %443 = vmatprep.subr.bf16.mxu0 0
  %444 = vmatpush1.bf16.msra.mxu0 %v374
  %445 = vmatprep.subr.bf16.mxu0 0
  %446 = vmatpush1.bf16.msra.mxu0 %v375
  %447 = vmatprep.subr.bf16.mxu0 0
  %448 = vmatpush1.bf16.msra.mxu0 %v376
  %449 = vmatprep.subr.bf16.mxu0 0
  %450 = vmatpush1.bf16.msra.mxu0 %v377
  %451 = vmatprep.subr.bf16.mxu0 0
  %452 = vmatpush1.bf16.msra.mxu0 %v378
  %453 = vmatprep.subr.bf16.mxu0 0
  %454 = vmatpush1.bf16.msra.mxu0 %v379
  %455 = vmatprep.subr.bf16.mxu0 0
  %456 = vmatpush1.bf16.msra.mxu0 %v380
  %457 = vmatprep.subr.bf16.mxu0 0
  %458 = vmatpush1.bf16.msra.mxu0 %v381
  %459 = vmatprep.subr.bf16.mxu0 0
  %460 = vmatpush1.bf16.msra.mxu0 %v382
  %461 = vmatprep.subr.bf16.mxu0 0
  %462 = vmatpush1.bf16.msra.mxu0 %v383
  %463 = vmatprep.subr.bf16.mxu0 0
  %464 = vmatpush1.bf16.msra.mxu0 %v384
  %465 = vmatprep.mubr.bf16.mxu0 %v167
  %466 = vmatmul.mubr.bf16.gmra.mrb[0].mxu0 %v166
  %v467 = vpop.f32.mrb[0].mxu0
  %v468 = vadd.f32 %v239, %v467
  %v469 = vpop.f32.mrb[0].mxu0
  %v470 = vpop.f32.mrb[0].mxu0
  %v471 = vpop.f32.mrb[0].mxu0
  %472 = vdwg.mxu0
  %473 = vmatprep.subr.bf16.mxu0 0
  %474 = vmatpush1.bf16.msra.mxu0 %v385
  %475 = vmatprep.subr.bf16.mxu0 0
  %476 = vmatpush1.bf16.msra.mxu0 %v386
  %477 = vmatprep.subr.bf16.mxu0 0
  %478 = vmatpush1.bf16.msra.mxu0 %v387
  %479 = vmatprep.subr.bf16.mxu0 0
  %480 = vmatpush1.bf16.msra.mxu0 %v388
  %481 = vmatprep.subr.bf16.mxu0 0
  %482 = vmatpush1.bf16.msra.mxu0 %v389
  %483 = vmatprep.subr.bf16.mxu0 0
  %484 = vmatpush1.bf16.msra.mxu0 %v390
  %485 = vmatprep.subr.bf16.mxu0 0
  %486 = vmatpush1.bf16.msra.mxu0 %v391
  %487 = vmatprep.subr.bf16.mxu0 0
  %488 = vmatpush1.bf16.msra.mxu0 %v392
  %489 = vmatprep.subr.bf16.mxu0 0
  %490 = vmatpush1.bf16.msra.mxu0 %v393
  %491 = vmatprep.subr.bf16.mxu0 0
  %492 = vmatpush1.bf16.msra.mxu0 %v394
  %493 = vmatprep.subr.bf16.mxu0 0
  %494 = vmatpush1.bf16.msra.mxu0 %v395
  %495 = vmatprep.subr.bf16.mxu0 0
  %496 = vmatpush1.bf16.msra.mxu0 %v396
  %497 = vmatprep.subr.bf16.mxu0 0
  %498 = vmatpush1.bf16.msra.mxu0 %v397
  %499 = vmatprep.subr.bf16.mxu0 0
  %500 = vmatpush1.bf16.msra.mxu0 %v398
  %501 = vmatprep.subr.bf16.mxu0 0
  %502 = vmatpush1.bf16.msra.mxu0 %v399
  %503 = vmatprep.subr.bf16.mxu0 0
  %504 = vmatpush1.bf16.msra.mxu0 %v400
  %505 = vmatprep.mubr.bf16.mxu0 %v169
  %506 = vmatmul.mubr.bf16.gmra.mrb[0].mxu0 %v168
  %v507 = vpop.f32.mrb[0].mxu0
  %v508 = vadd.f32 %v468, %v507
  %v509 = vpop.f32.mrb[0].mxu0
  %v510 = vpop.f32.mrb[0].mxu0
  %v511 = vpop.f32.mrb[0].mxu0
  %512 = vdwg.mxu0
  %513 = vst [vmem:[%s5] sm:$0xff] %v508
  // Predicated region
  $region22: #{multihead_forward.1} parent=0 // pred_check
    _
  $region23: #{multihead_forward.1} parent=0 // pred_check_branch
    %515 = sbr.rel (0) target = $region25
  $region24: #{multihead_forward.1} parent=0 // pred_region
    _
  $region25: #{multihead_forward.1} parent=0 // pred_fallthru
    _
  // Predicated region
  $region26: #{multihead_forward.1} parent=0 // pred_check
    _
  $region27: #{multihead_forward.1} parent=0 // pred_check_branch
    %517 = sbr.rel (0) target = $region29
  $region28: #{multihead_forward.1} parent=0 // pred_region
    _
  $region29: #{multihead_forward.1} parent=0 // pred_fallthru
    _

</llo_original>
